<compile_context>
chip_gen: v6e
topology: v6e:2x2x1
jax: 0.10.0
libtpu: 0.0.40
codegen_flags: <defaults>
</compile_context>

<pallas_src>
import math

import jax
import jax.numpy as jnp
from jax import lax
from jax.experimental import pallas as pl
from jax.experimental.pallas import tpu as pltpu

EPS = 1e-5
_VMEM_BUDGET = 48 * 1024 * 1024       # v7x-safe working budget for tile selection
_V5E_DEFAULT_SCOPED_VMEM = 16 * 1024 * 1024


def _round_up(x, m):
    return ((x + m - 1) // m) * m


def poincare_linear_kernel(x_ref, w_ref, b_ref, o_ref):
    # x_ref: (tm, K) in x.dtype (streamed row tile)
    # w_ref: (K, N) bf16, resident single VMEM copy
    # b_ref: (1, N) f32,  resident single VMEM copy
    # o_ref: (tm, N) in x.dtype
    x = x_ref[...].astype(jnp.bfloat16)            # cast in VMEM (no HBM copy)
    y = jnp.dot(x, w_ref[...], preferred_element_type=jnp.float32)
    y = y + b_ref[...]                             # bias broadcast over rows (f32)
    t = jnp.tanh(y)                                # EUP, f32
    # project_to_ball on the squared norm; rsqrt on the EUP slot.
    ss = jnp.sum(t * t, axis=-1, keepdims=True)
    limit = 1.0 - EPS
    scale = jnp.minimum(limit * lax.rsqrt(ss), 1.0)  # ss=0 -> inf -> 1
    o_ref[...] = (t * scale).astype(o_ref.dtype)


def prepare_poincare_params(weight, bias):
    """One-time parameter prep (hoisted out of the per-call path).

    weight: (N, K) nn.Linear layout -> (K, N) bf16 matmul operand.
    bias:   (N,) -> (1, N) f32.
    """
    w_t = jnp.asarray(weight, jnp.float32).T.astype(jnp.bfloat16)
    b2d = jnp.asarray(bias, jnp.float32).reshape(1, -1)
    return w_t, b2d


def _choose_tile(M, K, N, x_bytes, o_bytes, tm):
    """Pick the row-tile size and estimate the kernel's VMEM footprint."""
    tm = max(8, min(tm, _round_up(M, 8)))
    tm = _round_up(tm, 8)

    def est(tm_):
        return (2 * tm_ * K * x_bytes          # double-buffered x row tiles
                + 2 * tm_ * N * o_bytes        # double-buffered output tiles
                + K * N * 2 + _round_up(N, 128) * 4   # resident bf16 weight + f32 bias
                + tm_ * K * 2                  # in-kernel bf16 copy of the x tile
                + 2 * tm_ * N * 4              # f32 y / t temporaries
                + (2 << 20))                   # slack

    # Prefer keeping tm large (measured ~85% of HBM roofline at 512 vs ~63% at
    # 256); only shrink when the v7x-safe budget would be exceeded.
    while est(tm) > _VMEM_BUDGET and tm > 8:
        tm = max(8, _round_up(tm // 2, 8))
    return tm, est(tm)


def poincare_wrapper_forward(x, w_prepared, b_prepared, *, tm=512):
    """Fused Linear -> tanh -> project_to_ball.

    x: (..., K); w_prepared: (K, N) bf16; b_prepared: (1, N) f32
    (both from prepare_poincare_params). Returns (..., N) in x.dtype.
    """
    K, N = w_prepared.shape
    orig_shape = x.shape
    assert orig_shape[-1] == K, f"expected last dim {K}, got {orig_shape[-1]}"

    x2d = x.reshape(-1, K)                     # metadata-only, no HBM copy
    M = x2d.shape[0]

    x_bytes = jnp.dtype(x.dtype).itemsize
    o_bytes = x_bytes
    tm, vmem_est = _choose_tile(M, K, N, x_bytes, o_bytes, tm)

    vmem_limit = None
    if vmem_est > _V5E_DEFAULT_SCOPED_VMEM:    # v5e default scoped limit is 16 MiB
        vmem_limit = min(vmem_est + (8 << 20), 64 * 1024 * 1024)

    cost = pl.CostEstimate(
        flops=2 * M * K * N,
        transcendentals=M * N + M,             # tanh + rsqrt
        bytes_accessed=M * K * x_bytes + K * N * 2 + N * 4 + M * N * o_bytes,
    )

    out2d = pl.pallas_call(
        poincare_linear_kernel,
        out_shape=jax.ShapeDtypeStruct((M, N), x.dtype),
        grid=(pl.cdiv(M, tm),),                # partial last block masked by Pallas
        in_specs=[
            pl.BlockSpec((tm, K), lambda i: (i, 0)),             # streamed row tile
            pl.BlockSpec(memory_space=pltpu.MemorySpace.VMEM),   # resident weight (1 copy)
            pl.BlockSpec(memory_space=pltpu.MemorySpace.VMEM),   # resident bias   (1 copy)
        ],
        out_specs=pl.BlockSpec((tm, N), lambda i: (i, 0)),
        compiler_params=pltpu.CompilerParams(
            dimension_semantics=("parallel",),   # shard M-blocks across TCs (v7x)
            vmem_limit_bytes=vmem_limit,
        ),
        cost_estimate=cost,
    )(x2d, w_prepared, b_prepared)

    return out2d.reshape(*orig_shape[:-1], N)


def _reference(x, weight, bias):
    y = jnp.einsum("...k,nk->...n", x, weight) + bias
    t = jnp.tanh(y)
    norm = jnp.linalg.norm(t, axis=-1, keepdims=True)
    scale = jnp.where(norm > 1.0 - EPS, (1.0 - EPS) / norm, jnp.ones_like(norm))
    return t * scale


if __name__ == "__main__":
    # Small shapes: batch=2, seq=8, hidden(in)=32, out=32
    B, S, K, N = 2, 8, 32, 32
    key = jax.random.PRNGKey(0)
    kx, kw, kb = jax.random.split(key, 3)

    x = jax.random.normal(kx, (B, S, K), dtype=jnp.float32)
    # deterministic nn.Linear-style init: U(-1/sqrt(K), 1/sqrt(K))
    bound = 1.0 / math.sqrt(K)
    weight = jax.random.uniform(kw, (N, K), jnp.float32, -bound, bound)
    bias = jax.random.uniform(kb, (N,), jnp.float32, -bound, bound)

    # One-time parameter prep (hoisted out of the per-call path).
    w_prep, b_prep = prepare_poincare_params(weight, bias)

    out = poincare_wrapper_forward(x, w_prep, b_prep)
    out = jax.block_until_ready(out)

    ref = _reference(x, weight, bias)
    assert out.shape == (B, S, N), out.shape
    max_err = float(jnp.max(jnp.abs(out - ref)))
    # bf16 matmul operands -> relaxed tolerance vs the pure-f32 reference.
    assert jnp.allclose(out, ref, atol=2e-2, rtol=2e-2), f"mismatch: {max_err}"

    print("KERNEL_OK")
</pallas_src>

<mosaic_0001>
module attributes {stable_mosaic.version = 11 : i64} {
  func.func @poincare_linear_kernel(%arg0: i32, %arg1: memref<16x32xf32, #tpu.memory_space<vmem>>, %arg2: memref<32x32xbf16, #tpu.memory_space<vmem>>, %arg3: memref<1x32xf32, #tpu.memory_space<vmem>>, %arg4: memref<16x32xf32, #tpu.memory_space<vmem>>) attributes {dimension_semantics = [#tpu.dimension_semantics<parallel>], iteration_bounds = array<i64: 1>, scalar_prefetch = 0 : i64, scratch_operands = 0 : i64, tpu.core_type = #tpu.core_type<tc>, window_params = [{transform_indices = @transform_0, window_bounds = array<i64: 16, 32>}, {pipeline_mode = #tpu.pipeline_mode<synchronous>, transform_indices = @transform_1, window_bounds = array<i64: 32, 32>}, {pipeline_mode = #tpu.pipeline_mode<synchronous>, transform_indices = @transform_2, window_bounds = array<i64: 1, 32>}, {transform_indices = @transform_3, window_bounds = array<i64: 16, 32>}]} {
    %c0 = arith.constant 0 : index
    %c0_0 = arith.constant 0 : index
    %0 = vector.load %arg1[%c0, %c0_0] : memref<16x32xf32, #tpu.memory_space<vmem>>, vector<16x32xf32>
    %1 = arith.truncf %0 : vector<16x32xf32> to vector<16x32xbf16>
    %c0_1 = arith.constant 0 : index
    %c0_2 = arith.constant 0 : index
    %2 = vector.load %arg2[%c0_1, %c0_2] : memref<32x32xbf16, #tpu.memory_space<vmem>>, vector<32x32xbf16>
    %cst = arith.constant dense<0.000000e+00> : vector<16x32xf32>
    %3 = tpu.matmul %1, %2, %cst {dimension_numbers = #tpu.dot_dimension_numbers<[1], [0], [0], [1], [0, 0, 1, 1], [], []>} : vector<16x32xbf16>, vector<32x32xbf16>, vector<16x32xf32> -> vector<16x32xf32>
    %c0_3 = arith.constant 0 : index
    %c0_4 = arith.constant 0 : index
    %4 = vector.load %arg3[%c0_3, %c0_4] : memref<1x32xf32, #tpu.memory_space<vmem>>, vector<1x32xf32>
    %5 = vector.broadcast %4 : vector<1x32xf32> to vector<16x32xf32>
    %6 = arith.addf %3, %5 : vector<16x32xf32>
    %7 = math.tanh %6 : vector<16x32xf32>
    %8 = arith.mulf %7, %7 : vector<16x32xf32>
    %cst_5 = arith.constant dense<0.000000e+00> : vector<16xf32>
    %9 = vector.multi_reduction <add>, %8, %cst_5 [1] : vector<16x32xf32> to vector<16xf32>
    %10 = vector.shape_cast %9 : vector<16xf32> to vector<16x1xf32>
    %11 = math.rsqrt %10 : vector<16x1xf32>
    %cst_6 = arith.constant 0.999989986 : f32
    %12 = vector.broadcast %cst_6 : f32 to vector<16x1xf32>
    %13 = arith.mulf %12, %11 : vector<16x1xf32>
    %cst_7 = arith.constant 1.000000e+00 : f32
    %14 = vector.broadcast %cst_7 : f32 to vector<16x1xf32>
    %15 = arith.minimumf %13, %14 : vector<16x1xf32>
    %16 = vector.broadcast %15 : vector<16x1xf32> to vector<16x32xf32>
    %17 = arith.mulf %7, %16 : vector<16x32xf32>
    %c0_8 = arith.constant 0 : index
    %c0_9 = arith.constant 0 : index
    %18 = vector.load %arg4[%c0_8, %c0_9] : memref<16x32xf32, #tpu.memory_space<vmem>>, vector<16x32xf32>
    tpu.vector_store %arg4[%c0_8, %c0_9], %17 {strides = array<i32>} : memref<16x32xf32, #tpu.memory_space<vmem>>, vector<16x32xf32>,
    return
  }
  func.func @transform_0(%arg0: i32) -> (i32, i32) {
    %c0_i32 = arith.constant 0 : i32
    %c0_i32_0 = arith.constant 0 : i32
    return %arg0, %c0_i32 : i32, i32
  }
  func.func @transform_1(%arg0: i32) -> (i32, i32) {
    %c0_i32 = arith.constant 0 : i32
    %c0_i32_0 = arith.constant 0 : i32
    %c0_i32_1 = arith.constant 0 : i32
    return %c0_i32, %c0_i32_0 : i32, i32
  }
  func.func @transform_2(%arg0: i32) -> (i32, i32) {
    %c0_i32 = arith.constant 0 : i32
    %c0_i32_0 = arith.constant 0 : i32
    %c0_i32_1 = arith.constant 0 : i32
    return %c0_i32, %c0_i32_0 : i32, i32
  }
  func.func @transform_3(%arg0: i32) -> (i32, i32) {
    %c0_i32 = arith.constant 0 : i32
    %c0_i32_0 = arith.constant 0 : i32
    return %arg0, %c0_i32 : i32, i32
  }
}

</mosaic_0001>

<llo_original>
// kernel: tpu_custom_call.1
$region0: #{tpu_custom_call.1}
  #allocation0 [shape = 'u32[]', space=smem, size = 0x4, offset = 0x4, fixed_abs, tag = 'smem constant byte address 0x4 - core index']
  #allocation1 [shape = 'u32[144,128]{1,0:T(1,128)}', space=vmem, size = 0x12000, scoped, tag = 'internal scratch']
  %s0 = inlined_call_operand.hbm [shape: f32[16,32], index: 0, kind: input, shape index: {}]
  %s1 = inlined_call_operand.hbm [shape: bf16[32,32], index: 1, kind: input, shape index: {}]
  %s2 = inlined_call_operand.vmem [shape: f32[1,32], index: 2, kind: input, shape index: {}]
  %s3 = inlined_call_operand.hbm [shape: f32[16,32], index: 3, kind: output, shape index: {}]
  %s4 = sld [smem:[#allocation0]]
  $region30: #{tpu_custom_call.1} parent=0
    _
  %s6 = ssub.s32 1, %s4
  %s7 = scalar_select 0, %s6, %s4
  $region1: #{tpu_custom_call.1} parent=0
    #allocation2 [shape = 'u8[8192]{0}', space=vmem, size = 0x2000, scoped, tag = 'input window, operand 0, single buffered']
    #allocation3 [shape = 's32[1]{0}', space=sflag, size = 0x4, scoped, tag = 'scoped memory for tpu_custom_call.1']
    #allocation4 [shape = 's32[1]{0}', space=sflag, size = 0x4, scoped, tag = 'scoped memory for tpu_custom_call.1']
    #allocation5 [shape = 'u8[8192]{0}', space=vmem, size = 0x2000, scoped, tag = 'input window, operand 1, single buffered']
    #allocation6 [shape = 's32[1]{0}', space=sflag, size = 0x4, scoped, tag = 'scoped memory for tpu_custom_call.1']
    #allocation7 [shape = 'u8[8192]{0}', space=vmem, size = 0x2000, scoped, tag = 'output window, operand 0, single buffered']
    %8 = vsyncpa [#allocation3], 0
    %9 = vsyncpa [#allocation6], 0
    %10 = vsyncpa [#allocation4], 0
    // Predicated region
    $region2: #{tpu_custom_call.1} parent=1 // pred_check
      _
    $region3: #{tpu_custom_call.1} parent=1 // pred_check_branch
      %12 = sbr.rel (0) target = $region5
    $region4: #{tpu_custom_call.1} parent=1 // pred_region
      %s14 = ssub.s32 256, 256
      %15 = vsyncadd [#allocation3], %s14
      %s16 = sshll.u32 [#allocation2], 4
      %s17 = int_to_ptr.vmem [resolvable:$true] %s16
      %22 = dma.hbm_to_vmem [thread:$0]  %s0, 256, %s17, [#allocation3], 128, 128, 8
    $region5: #{tpu_custom_call.1} parent=1 // pred_fallthru
      _
    // Predicated region
    $region6: #{tpu_custom_call.1} parent=1 // pred_check
      _
    $region7: #{tpu_custom_call.1} parent=1 // pred_check_branch
      %24 = sbr.rel (0) target = $region9
    $region8: #{tpu_custom_call.1} parent=1 // pred_region
      %s26 = ssub.s32 256, 256
      %27 = vsyncadd [#allocation6], %s26
      %s28 = sshll.u32 [#allocation5], 4
      %s29 = int_to_ptr.vmem [resolvable:$true] %s28
      %34 = dma.hbm_to_vmem [thread:$0]  %s1, 256, %s29, [#allocation6], 64, 64, 4
    $region9: #{tpu_custom_call.1} parent=1 // pred_fallthru
      _
    // Predicated region
    $region10: #{tpu_custom_call.1} parent=1 // pred_check
      _
    $region11: #{tpu_custom_call.1} parent=1 // pred_check_branch
      %36 = sbr.rel (0) target = $region13
    $region12: #{tpu_custom_call.1} parent=1 // pred_region
      _
    $region13: #{tpu_custom_call.1} parent=1 // pred_fallthru
      _
    // Predicated region
    $region14: #{tpu_custom_call.1} parent=1 // pred_check
      _
    $region15: #{tpu_custom_call.1} parent=1 // pred_check_branch
      %38 = sbr.rel (0) target = $region17
    $region16: #{tpu_custom_call.1} parent=1 // pred_region
      %39 = dma.done [#allocation3], 256
    $region17: #{tpu_custom_call.1} parent=1 // pred_fallthru
      _
    // Predicated region
    $region18: #{tpu_custom_call.1} parent=1 // pred_check
      _
    $region19: #{tpu_custom_call.1} parent=1 // pred_check_branch
      %41 = sbr.rel (0) target = $region21
    $region20: #{tpu_custom_call.1} parent=1 // pred_region
      %42 = dma.done [#allocation6], 256
    $region21: #{tpu_custom_call.1} parent=1 // pred_fallthru
      _
    %v44 = vld [vmem:[#allocation2] sm:$0xff]
    %v45 = vld [vmem:[#allocation2 + $0x8] sm:$0xff]
    %v46 = vpack.c.bf16 %v45, %v44
    %v47 = vld [vmem:[#allocation5] sm:$0xf]
    %v48 = vld [vmem:[#allocation5 + $0x4] sm:$0xf]
    %v49 = vld [vmem:[#allocation5 + $0x8] sm:$0xf]
    %v50 = vld [vmem:[#allocation5 + $0xc] sm:$0xf]
    %v51 = vld [vmem:[%s2] sm:$0x1]
    %v53 = vlaneseq
    %v54 = vshrl.u32 %v53, 7
    %v55 = vsub.s32 0, %v54
    %v56 = vrot.slane %v51, %v55
    %v62 = vunpack.c.l.b16 %v47
    %v63 = vunpack.c.l.b16 %v48
    %v64 = vunpack.c.l.b16 %v49
    %v65 = vunpack.c.l.b16 %v50
    %v66 = vpack.c.b16 %v63, %v62
    %v67 = vpack.c.b16 %v65, %v64
    %vm70 = vcmask 261120
    %v72 = vsel %vm70, %v46, 0
    %74 = vmatprep.subr.bf16.mxu0 0
    %75 = vmatpush1.bf16.msra.mxu0 0
    %76 = vmatprep.subr.bf16.mxu0 0
    %77 = vmatpush1.bf16.msra.mxu0 0
    %78 = vmatprep.subr.bf16.mxu0 0
    %79 = vmatpush1.bf16.msra.mxu0 0
    %80 = vmatprep.subr.bf16.mxu0 0
    %81 = vmatpush1.bf16.msra.mxu0 0
    %82 = vmatprep.subr.bf16.mxu0 0
    %83 = vmatpush1.bf16.msra.mxu0 0
    %84 = vmatprep.subr.bf16.mxu0 0
    %85 = vmatpush1.bf16.msra.mxu0 0
    %86 = vmatprep.subr.bf16.mxu0 0
    %87 = vmatpush1.bf16.msra.mxu0 %v67
    %88 = vmatprep.subr.bf16.mxu0 0
    %89 = vmatpush1.bf16.msra.mxu0 %v66
    %90 = vmatprep.subr.bf16.mxu0 0
    %91 = vmatpush2.bf16.msra.mxu0 0
    %92 = vmatprep.subr.bf16.mxu0 0
    %93 = vmatpush2.bf16.msra.mxu0 0
    %94 = vmatprep.subr.bf16.mxu0 0
    %95 = vmatpush2.bf16.msra.mxu0 0
    %96 = vmatprep.subr.bf16.mxu0 0
    %97 = vmatpush2.bf16.msra.mxu0 0
    %98 = vmatprep.subr.bf16.mxu0 0
    %99 = vmatpush2.bf16.msra.mxu0 0
    %100 = vmatprep.subr.bf16.mxu0 0
    %101 = vmatpush2.bf16.msra.mxu0 0
    %102 = vmatprep.subr.bf16.mxu0 0
    %103 = vmatpush2.bf16.msra.mxu0 0
    %104 = vmatprep.subr.bf16.mxu0 0
    %105 = vmatpush2.bf16.msra.mxu0 0
    %106 = vmatprep.mubr.bf16.mxu0 0
    %107 = vmatmul.mubr.bf16.gmra.mxu0 %v72
    %v108 = vpop.f32.mrf.mxu0
    %v109 = vadd.f32 %v56, %v108
    %v110 = vpop.f32.mrf.mxu0
    %v111 = vpop.f32.mrf.mxu0
    %v112 = vadd.f32 %v56, %v111
    %v113 = vpop.f32.mrf.mxu0
    %114 = vdwg.mxu0
    %v115 = vtanh.pop %v109
    %v116 = vtanh.pop %v112
    %v117 = vmul.f32 %v115, %v115
    %v118 = vmul.f32 %v116, %v116
    %v119 = vsel %vm70, %v117, 0.0
    %120 = vadd.xlane.f32.xlu0 %v119
    %v121 = vpop.xlane.xlu0 %120
    %v122 = vsel %vm70, %v118, 0.0
    %123 = vadd.xlane.f32.xlu0 %v122
    %v124 = vpop.xlane.xlu0 %123
    %v125 = vrsqrt.pop %v121
    %v126 = vrsqrt.pop %v124
    %v127 = vmul.f32 %v125, 0.99999
    %v128 = vmul.f32 %v126, 0.99999
    %v129 = vmin.f32 %v127, 1.0
    %v130 = vmin.f32 %v128, 1.0
    %v131 = vmul.f32 %v115, %v129
    %v132 = vmul.f32 %v116, %v130
    %133 = vst.msk [vmem:[#allocation7] sm:$0xff] %vm70, %v131
    %134 = vst.msk [vmem:[#allocation7 + $0x8] sm:$0xff] %vm70, %v132
    // Predicated region
    $region22: #{tpu_custom_call.1} parent=1 // pred_check
      _
    $region23: #{tpu_custom_call.1} parent=1 // pred_check_branch
      %136 = sbr.rel (0) target = $region25
    $region24: #{tpu_custom_call.1} parent=1 // pred_region
      %s138 = ssub.s32 256, 256
      %139 = vsyncadd [#allocation4], %s138
      %s140 = sshll.u32 [#allocation7], 4
      %s141 = int_to_ptr.vmem [resolvable:$true] %s140
      %146 = dma.vmem_to_hbm [thread:$0]  %s141, 256, %s3, [#allocation4], 128, 128, 8
    $region25: #{tpu_custom_call.1} parent=1 // pred_fallthru
      _
    // Predicated region
    $region26: #{tpu_custom_call.1} parent=1 // pred_check
      _
    $region27: #{tpu_custom_call.1} parent=1 // pred_check_branch
      %148 = sbr.rel (0) target = $region29
    $region28: #{tpu_custom_call.1} parent=1 // pred_region
      %149 = dma.done [#allocation4], 256
    $region29: #{tpu_custom_call.1} parent=1 // pred_fallthru
      _
    %150 = vsyncpa [#allocation3], 1
    %151 = vsyncpa [#allocation6], 1
    %152 = vsyncpa [#allocation4], 1

</llo_original>
